<compile_context>
chip_gen: v7x
topology: tpu7x:2x2x1
jax: 0.10.0
libtpu: 0.0.40
codegen_flags: <defaults>
</compile_context>

<pallas_src>
import functools

import jax
import jax.numpy as jnp
import numpy as np
from jax import lax
from jax.experimental import pallas as pl
from jax.experimental.pallas import tpu as pltpu

_EPS = 1e-8  # nn.CosineSimilarity default eps


def _cos_loss_kernel(yp_ref, y_ref, o_ref, *, total_rows, row_tile):
    """yp_ref, y_ref: (row_tile, F) tiles.  o_ref: (1, 1, 128) partial-sum slot."""
    i = pl.program_id(0)

    yp = yp_ref[...].astype(jnp.float32)
    yy = y_ref[...].astype(jnp.float32)

    # Per-row reductions over the lane axis (feature dim last -> lane-dense).
    dot = jnp.sum(yp * yy, axis=-1, keepdims=True)   # (TR, 1)
    n1 = jnp.sum(yp * yp, axis=-1, keepdims=True)    # (TR, 1)
    n2 = jnp.sum(yy * yy, axis=-1, keepdims=True)    # (TR, 1)

    cos = dot * lax.rsqrt(jnp.maximum(n1 * n2, jnp.float32(_EPS * _EPS)))

    # Mask rows of the ragged last block (reads unspecified data past R) so they
    # contribute nothing; eps clamp + where keep any garbage NaN/Inf out.
    row_ids = i * row_tile + lax.broadcasted_iota(jnp.int32, (row_tile, 1), 0)
    valid = row_ids < total_rows
    part = jnp.sum(jnp.where(valid, jnp.float32(1.0) - cos, jnp.float32(0.0)))

    # Lane-dense store of this block's partial sum (replicated across 128 lanes).
    o_ref[...] = jnp.full(o_ref.shape, part, dtype=jnp.float32)


def _pick_row_tile(n_rows, feat, itemsize, requested=None,
                   target_block_bytes=1 << 20, max_rows=4096):
    """Row tile: multiple of 8, ~1 MiB of input per block (<< VMEM budgets even with
    2 inputs x 2 pipeline buffers on v7x 64 MiB / v5e 16 MiB default scoped)."""
    if requested is not None:
        rows = max(8, (int(requested) // 8) * 8)
    else:
        rows = target_block_bytes // max(1, feat * itemsize)
        rows = int(max(8, min(max_rows, rows)))
        rows = max(8, (rows // 8) * 8)
    if n_rows <= rows:
        return n_rows  # single block == full array dims (always a legal BlockSpec)
    return rows


def det_fc_loss(yp, y, *, row_tile=None):
    """Pallas implementation of DetFCLoss.forward(yp, y) -> scalar."""
    assert yp.shape == y.shape, "yp and y must have identical shapes"
    F = yp.shape[-1]
    R = int(np.prod(yp.shape[:-1])) if yp.ndim > 1 else 1

    # Keep original dtype (bf16 stays bf16 on the wire); upcast happens in-kernel.
    yp2 = yp.reshape(R, F)
    y2 = y.reshape(R, F)

    itemsize = max(jnp.dtype(yp.dtype).itemsize, jnp.dtype(y.dtype).itemsize)
    tile = _pick_row_tile(R, F, itemsize, requested=row_tile)
    n_blocks = -(-R // tile)  # cdiv

    # TODO(synk): for very large F (>> a few thousand) add a feature-axis reduction
    # grid dimension so the row tile stays large independent of feature width.

    kernel = functools.partial(_cos_loss_kernel, total_rows=R, row_tile=tile)

    cost = pl.CostEstimate(
        flops=6 * R * F,
        transcendentals=R,
        bytes_accessed=R * F * (jnp.dtype(yp.dtype).itemsize
                                + jnp.dtype(y.dtype).itemsize) + n_blocks * 128 * 4,
    )

    partials = pl.pallas_call(
        kernel,
        out_shape=jax.ShapeDtypeStruct((n_blocks, 1, 128), jnp.float32),
        grid_spec=pltpu.PrefetchScalarGridSpec(
            num_scalar_prefetch=0,
            grid=(n_blocks,),
            in_specs=[
                pl.BlockSpec((tile, F), lambda i: (i, 0)),
                pl.BlockSpec((tile, F), lambda i: (i, 0)),
            ],
            out_specs=pl.BlockSpec((1, 1, 128), lambda i: (i, 0, 0)),
        ),
        # Each grid step writes its own partial-sum slot -> fully parallel axis
        # (lets Mosaic shard blocks across both TensorCores on v7x; no-op on v5e/v6e).
        compiler_params=pltpu.CompilerParams(dimension_semantics=("parallel",)),
        cost_estimate=cost,
    )(yp2, y2)

    # Tiny final reduction + mean in plain JAX.
    return jnp.sum(partials[:, 0, 0]) / jnp.float32(R)


def _reference(yp, y, eps=_EPS):
    """Pure-JAX reference matching torch.nn.CosineSimilarity semantics."""
    yp = yp.astype(jnp.float32)
    y = y.astype(jnp.float32)
    dot = jnp.sum(yp * y, axis=-1)
    n1 = jnp.sum(yp * yp, axis=-1)
    n2 = jnp.sum(y * y, axis=-1)
    cos = dot / jnp.sqrt(jnp.maximum(n1 * n2, eps * eps))
    return jnp.mean(1.0 - cos)


if __name__ == "__main__":
    # Small shapes: batch=2, seq=16, hidden=128 (hidden kept at a lane-dense 128).
    B, S, Hd = 2, 16, 128
    key = jax.random.PRNGKey(0)
    k1, k2, k3, k4 = jax.random.split(key, 4)
    yp = jax.random.normal(k1, (B, S, Hd), jnp.float32)
    y = jax.random.normal(k2, (B, S, Hd), jnp.float32)

    loss = det_fc_loss(yp, y)
    jax.block_until_ready(loss)
    np.testing.assert_allclose(np.asarray(loss), np.asarray(_reference(yp, y)),
                               rtol=1e-5, atol=1e-5)

    # Multi-block + ragged last block path (R=111 rows, forced 16-row tile):
    # exercises the in-kernel mask replacing the old jnp.pad.
    yp_r = jax.random.normal(k3, (3, 37, Hd), jnp.float32)
    y_r = jax.random.normal(k4, (3, 37, Hd), jnp.float32)
    loss_r = det_fc_loss(yp_r, y_r, row_tile=16)
    jax.block_until_ready(loss_r)
    np.testing.assert_allclose(np.asarray(loss_r), np.asarray(_reference(yp_r, y_r)),
                               rtol=1e-5, atol=1e-5)

    print("KERNEL_OK")
</pallas_src>

<mosaic_0001>
module attributes {stable_mosaic.version = 11 : i64} {
  func.func @_cos_loss_kernel(%arg0: i32, %arg1: memref<32x128xf32, #tpu.memory_space<vmem>>, %arg2: memref<32x128xf32, #tpu.memory_space<vmem>>, %arg3: memref<1x1x128xf32, #tpu.memory_space<vmem>>) attributes {dimension_semantics = [#tpu.dimension_semantics<parallel>], iteration_bounds = array<i64: 1>, scalar_prefetch = 0 : i64, scratch_operands = 0 : i64, tpu.core_type = #tpu.core_type<tc>, window_params = [{transform_indices = @transform_0, window_bounds = array<i64: 32, 128>}, {transform_indices = @transform_1, window_bounds = array<i64: 32, 128>}, {transform_indices = @transform_2, window_bounds = array<i64: 1, 1, 128>}]} {
    %c0 = arith.constant 0 : index
    %c0_0 = arith.constant 0 : index
    %0 = vector.load %arg1[%c0, %c0_0] : memref<32x128xf32, #tpu.memory_space<vmem>>, vector<32x128xf32>
    %c0_1 = arith.constant 0 : index
    %c0_2 = arith.constant 0 : index
    %1 = vector.load %arg2[%c0_1, %c0_2] : memref<32x128xf32, #tpu.memory_space<vmem>>, vector<32x128xf32>
    %2 = arith.mulf %0, %1 : vector<32x128xf32>
    %cst = arith.constant dense<0.000000e+00> : vector<32xf32>
    %3 = vector.multi_reduction <add>, %2, %cst [1] : vector<32x128xf32> to vector<32xf32>
    %4 = vector.shape_cast %3 : vector<32xf32> to vector<32x1xf32>
    %5 = arith.mulf %0, %0 : vector<32x128xf32>
    %cst_3 = arith.constant dense<0.000000e+00> : vector<32xf32>
    %6 = vector.multi_reduction <add>, %5, %cst_3 [1] : vector<32x128xf32> to vector<32xf32>
    %7 = vector.shape_cast %6 : vector<32xf32> to vector<32x1xf32>
    %8 = arith.mulf %1, %1 : vector<32x128xf32>
    %cst_4 = arith.constant dense<0.000000e+00> : vector<32xf32>
    %9 = vector.multi_reduction <add>, %8, %cst_4 [1] : vector<32x128xf32> to vector<32xf32>
    %10 = vector.shape_cast %9 : vector<32xf32> to vector<32x1xf32>
    %11 = arith.mulf %7, %10 : vector<32x1xf32>
    %cst_5 = arith.constant 1.000000e-16 : f32
    %12 = vector.broadcast %cst_5 : f32 to vector<32x1xf32>
    %13 = arith.maximumf %11, %12 : vector<32x1xf32>
    %14 = math.rsqrt %13 : vector<32x1xf32>
    %15 = arith.mulf %4, %14 : vector<32x1xf32>
    %c32_i32 = arith.constant 32 : i32
    %16 = arith.muli %arg0, %c32_i32 : i32
    %17 = tpu.iota {dimensions = array<i32: 0>} : vector<32x1xi32>
    %18 = vector.broadcast %16 : i32 to vector<32x1xi32>
    %19 = arith.addi %18, %17 : vector<32x1xi32>
    %c32_i32_6 = arith.constant 32 : i32
    %20 = vector.broadcast %c32_i32_6 : i32 to vector<32x1xi32>
    %21 = arith.cmpi slt, %19, %20 : vector<32x1xi32>
    %cst_7 = arith.constant 1.000000e+00 : f32
    %22 = vector.broadcast %cst_7 : f32 to vector<32x1xf32>
    %23 = arith.subf %22, %15 : vector<32x1xf32>
    %cst_8 = arith.constant 0.000000e+00 : f32
    %24 = vector.broadcast %cst_8 : f32 to vector<32x1xf32>
    %25 = arith.select %21, %23, %24 : vector<32x1xi1>, vector<32x1xf32>
    %26 = vector.shape_cast %25 : vector<32x1xf32> to vector<1x32x1xf32>
    %cst_9 = arith.constant dense<0.000000e+00> : vector<1xf32>
    %27 = vector.multi_reduction <add>, %26, %cst_9 [1, 2] : vector<1x32x1xf32> to vector<1xf32>
    %28 = vector.shape_cast %27 : vector<1xf32> to vector<1x1x1xf32>
    %29 = vector.extract %28[0, 0, 0] : f32 from vector<1x1x1xf32>
    %30 = vector.broadcast %29 : f32 to vector<1x1x128xf32>
    %c0_10 = arith.constant 0 : index
    %c0_11 = arith.constant 0 : index
    %c0_12 = arith.constant 0 : index
    %31 = vector.load %arg3[%c0_10, %c0_11, %c0_12] : memref<1x1x128xf32, #tpu.memory_space<vmem>>, vector<1x1x128xf32>
    tpu.vector_store %arg3[%c0_10, %c0_11, %c0_12], %30 {strides = array<i32>} : memref<1x1x128xf32, #tpu.memory_space<vmem>>, vector<1x1x128xf32>,
    return
  }
  func.func @transform_0(%arg0: i32) -> (i32, i32) {
    %c0_i32 = arith.constant 0 : i32
    %c0_i32_0 = arith.constant 0 : i32
    return %arg0, %c0_i32 : i32, i32
  }
  func.func @transform_1(%arg0: i32) -> (i32, i32) {
    %c0_i32 = arith.constant 0 : i32
    %c0_i32_0 = arith.constant 0 : i32
    return %arg0, %c0_i32 : i32, i32
  }
  func.func @transform_2(%arg0: i32) -> (i32, i32, i32) {
    %c0_i32 = arith.constant 0 : i32
    %c0_i32_0 = arith.constant 0 : i32
    %c0_i32_1 = arith.constant 0 : i32
    return %arg0, %c0_i32, %c0_i32_0 : i32, i32, i32
  }
}

</mosaic_0001>

<llo_original>
// kernel: tpu_custom_call.1
$region0: #{tpu_custom_call.1}
  #allocation0 [shape = 'u32[]', space=smem, size = 0x4, offset = 0x4, fixed_abs, tag = 'smem constant byte address 0x4 - core index']
  #allocation1 [shape = 'u32[144,128]{1,0:T(1,128)}', space=vmem, size = 0x12000, scoped, tag = 'internal scratch']
  %s0 = inlined_call_operand.hbm [shape: f32[32,128], index: 0, kind: input, shape index: {}]
  %s1 = inlined_call_operand.hbm [shape: f32[32,128], index: 1, kind: input, shape index: {}]
  %s2 = inlined_call_operand.hbm [shape: f32[1,1,128], index: 2, kind: output, shape index: {}]
  %s3 = sld [smem:[#allocation0]]
  $region26: #{tpu_custom_call.1} parent=0
    _
  %s5 = ssub.s32 1, %s3
  %s6 = scalar_select 0, %s5, %s3
  $region1: #{tpu_custom_call.1} parent=0
    #allocation2 [shape = 'u8[16384]{0}', space=vmem, size = 0x4000, scoped, tag = 'input window, operand 0, single buffered']
    #allocation3 [shape = 's32[1]{0}', space=sflag, size = 0x4, scoped, tag = 'scoped memory for tpu_custom_call.1']
    #allocation4 [shape = 's32[1]{0}', space=sflag, size = 0x4, scoped, tag = 'scoped memory for tpu_custom_call.1']
    #allocation5 [shape = 'u8[16384]{0}', space=vmem, size = 0x4000, scoped, tag = 'input window, operand 1, single buffered']
    #allocation6 [shape = 's32[1]{0}', space=sflag, size = 0x4, scoped, tag = 'scoped memory for tpu_custom_call.1']
    #allocation7 [shape = 'u8[512]{0}', space=vmem, size = 0x400, scoped, tag = 'output window, operand 0, single buffered']
    %7 = vsyncpa [#allocation3], 0
    %8 = vsyncpa [#allocation6], 0
    %9 = vsyncpa [#allocation4], 0
    // Predicated region
    $region2: #{tpu_custom_call.1} parent=1 // pred_check
      _
    $region3: #{tpu_custom_call.1} parent=1 // pred_check_branch
      %11 = sbr.rel (0) target = $region5
    $region4: #{tpu_custom_call.1} parent=1 // pred_region
      %s13 = ssub.s32 512, 512
      %14 = vsyncadd [#allocation3], %s13
      %s15 = sshll.u32 [#allocation2], 4
      %s16 = int_to_ptr.vmem [resolvable:$true] %s15
      %21 = dma.hbm_to_vmem [thread:$0]  %s0, 512, %s16, [#allocation3], 128, 128, 8
    $region5: #{tpu_custom_call.1} parent=1 // pred_fallthru
      _
    // Predicated region
    $region6: #{tpu_custom_call.1} parent=1 // pred_check
      _
    $region7: #{tpu_custom_call.1} parent=1 // pred_check_branch
      %23 = sbr.rel (0) target = $region9
    $region8: #{tpu_custom_call.1} parent=1 // pred_region
      %s25 = ssub.s32 512, 512
      %26 = vsyncadd [#allocation6], %s25
      %s27 = sshll.u32 [#allocation5], 4
      %s28 = int_to_ptr.vmem [resolvable:$true] %s27
      %33 = dma.hbm_to_vmem [thread:$0]  %s1, 512, %s28, [#allocation6], 128, 128, 8
    $region9: #{tpu_custom_call.1} parent=1 // pred_fallthru
      _
    // Predicated region
    $region10: #{tpu_custom_call.1} parent=1 // pred_check
      _
    $region11: #{tpu_custom_call.1} parent=1 // pred_check_branch
      %35 = sbr.rel (0) target = $region13
    $region12: #{tpu_custom_call.1} parent=1 // pred_region
      %36 = dma.done [#allocation3], 512
    $region13: #{tpu_custom_call.1} parent=1 // pred_fallthru
      _
    // Predicated region
    $region14: #{tpu_custom_call.1} parent=1 // pred_check
      _
    $region15: #{tpu_custom_call.1} parent=1 // pred_check_branch
      %38 = sbr.rel (0) target = $region17
    $region16: #{tpu_custom_call.1} parent=1 // pred_region
      %39 = dma.done [#allocation6], 512
    $region17: #{tpu_custom_call.1} parent=1 // pred_fallthru
      _
    %v40 = vld [vmem:[#allocation2] sm:$0xff]
    %v41 = vld [vmem:[#allocation2 + $0x8] sm:$0xff]
    %v42 = vld [vmem:[#allocation2 + $0x10] sm:$0xff]
    %v43 = vld [vmem:[#allocation2 + $0x18] sm:$0xff]
    %v44 = vld [vmem:[#allocation5] sm:$0xff]
    %v45 = vld [vmem:[#allocation5 + $0x8] sm:$0xff]
    %v46 = vld [vmem:[#allocation5 + $0x10] sm:$0xff]
    %v47 = vld [vmem:[#allocation5 + $0x18] sm:$0xff]
    %v48 = vmul.f32 %v40, %v44
    %v49 = vmul.f32 %v41, %v45
    %v50 = vmul.f32 %v42, %v46
    %v51 = vmul.f32 %v43, %v47
    %52 = vadd.xlane.f32.xlu0 %v48
    %v53 = vpop.xlane.xlu0 %52
    %54 = vadd.xlane.f32.xlu0 %v49
    %v55 = vpop.xlane.xlu0 %54
    %56 = vadd.xlane.f32.xlu0 %v50
    %v57 = vpop.xlane.xlu0 %56
    %58 = vadd.xlane.f32.xlu0 %v51
    %v59 = vpop.xlane.xlu0 %58
    %v60 = vmul.f32 %v40, %v40
    %v61 = vmul.f32 %v41, %v41
    %v62 = vmul.f32 %v42, %v42
    %v63 = vmul.f32 %v43, %v43
    %64 = vadd.xlane.f32.xlu0 %v60
    %v65 = vpop.xlane.xlu0 %64
    %66 = vadd.xlane.f32.xlu0 %v61
    %v67 = vpop.xlane.xlu0 %66
    %68 = vadd.xlane.f32.xlu0 %v62
    %v69 = vpop.xlane.xlu0 %68
    %70 = vadd.xlane.f32.xlu0 %v63
    %v71 = vpop.xlane.xlu0 %70
    %v72 = vmul.f32 %v44, %v44
    %v73 = vmul.f32 %v45, %v45
    %v74 = vmul.f32 %v46, %v46
    %v75 = vmul.f32 %v47, %v47
    %76 = vadd.xlane.f32.xlu0 %v72
    %v77 = vpop.xlane.xlu0 %76
    %78 = vadd.xlane.f32.xlu0 %v73
    %v79 = vpop.xlane.xlu0 %78
    %80 = vadd.xlane.f32.xlu0 %v74
    %v81 = vpop.xlane.xlu0 %80
    %82 = vadd.xlane.f32.xlu0 %v75
    %v83 = vpop.xlane.xlu0 %82
    %v84 = vmul.f32 %v65, %v77
    %v85 = vmul.f32 %v67, %v79
    %v86 = vmul.f32 %v69, %v81
    %v87 = vmul.f32 %v71, %v83
    %v88 = vmax.f32 %v84, 1e-16
    %v89 = vmax.f32 %v85, 1e-16
    %v90 = vmax.f32 %v86, 1e-16
    %v91 = vmax.f32 %v87, 1e-16
    %v92 = vrsqrt.pop %v88
    %v93 = vrsqrt.pop %v89
    %v94 = vrsqrt.pop %v90
    %v95 = vrsqrt.pop %v91
    %v96 = vmul.f32 %v53, %v92
    %v97 = vmul.f32 %v55, %v93
    %v98 = vmul.f32 %v57, %v94
    %v99 = vmul.f32 %v59, %v95
    %s100 = smul.u32 0, 32
    %v101 = vlaneseq
    %v102 = vshrl.u32 %v101, 7
    %v103 = vadd.s32 %v102, 8
    %v104 = vadd.s32 %v102, 16
    %v105 = vadd.s32 %v102, 24
    %v106 = vstv %s100
    %v107 = vadd.s32 %v106, %v102
    %v108 = vadd.s32 %v106, %v103
    %v109 = vadd.s32 %v106, %v104
    %v110 = vadd.s32 %v106, %v105
    %vm111 = vcmp.lt.s32.totalorder %v107, 32
    %vm112 = vcmp.lt.s32.totalorder %v108, 32
    %vm113 = vcmp.lt.s32.totalorder %v109, 32
    %vm114 = vcmp.lt.s32.totalorder %v110, 32
    %v115 = vsub.f32 1.0, %v96
    %v116 = vsub.f32 1.0, %v97
    %v117 = vsub.f32 1.0, %v98
    %v118 = vsub.f32 1.0, %v99
    %v119 = vsel %vm111, %v115, 0.0
    %v120 = vsel %vm112, %v116, 0.0
    %v121 = vsel %vm113, %v117, 0.0
    %v122 = vsel %vm114, %v118, 0.0
    %vm123 = vcmask 7168
    %v124 = vsel %vm123, %v119, 0.0
    %v125 = vsel %vm123, %v120, 0.0
    %v126 = vadd.f32 %v124, %v125
    %v127 = vsel %vm123, %v121, 0.0
    %v128 = vadd.f32 %v126, %v127
    %v129 = vsel %vm123, %v122, 0.0
    %v130 = vadd.f32 %v128, %v129
    %131 = vadd.xlane.f32.xlu0 %v130
    %v132 = vpop.xlane.xlu0 %131
    %v133 = vrot.slane %v132, 4
    %v134 = vadd.f32 %v132, %v133
    %v135 = vrot.slane %v134, 2
    %v136 = vadd.f32 %v134, %v135
    %v137 = vrot.slane %v136, 1
    %v138 = vadd.f32 %v136, %v137
    %s139 = vtos %v138
    %v140 = vstv %s139
    %141 = vst [vmem:[#allocation7] sm:$0x1] %v140
    // Predicated region
    $region18: #{tpu_custom_call.1} parent=1 // pred_check
      _
    $region19: #{tpu_custom_call.1} parent=1 // pred_check_branch
      %143 = sbr.rel (0) target = $region21
    $region20: #{tpu_custom_call.1} parent=1 // pred_region
      %s145 = ssub.s32 16, 16
      %146 = vsyncadd [#allocation4], %s145
      %s148 = sshll.u32 [#allocation7], 4
      %s149 = int_to_ptr.vmem [resolvable:$true] %s148
      %151 = dma.vmem_to_hbm [thread:$0]  %s149, 16, %s2, [#allocation4]
    $region21: #{tpu_custom_call.1} parent=1 // pred_fallthru
      _
    // Predicated region
    $region22: #{tpu_custom_call.1} parent=1 // pred_check
      _
    $region23: #{tpu_custom_call.1} parent=1 // pred_check_branch
      %153 = sbr.rel (0) target = $region25
    $region24: #{tpu_custom_call.1} parent=1 // pred_region
      %154 = dma.done [#allocation4], 16
    $region25: #{tpu_custom_call.1} parent=1 // pred_fallthru
      _
    %155 = vsyncpa [#allocation3], 1
    %156 = vsyncpa [#allocation6], 1
    %157 = vsyncpa [#allocation4], 1

</llo_original>
